<compile_context>
chip_gen: v5e
topology: v5e:2x2
jax: 0.10.0
libtpu: 0.0.40
codegen_flags: <defaults>
</compile_context>

<pallas_src>
import jax
import jax.numpy as jnp
from jax.experimental import pallas as pl
from jax.experimental.pallas import tpu as pltpu

F32 = jnp.float32


# ----------------------------------------------------------------------------
# Runtime probe: does pltpu.roll match jnp.roll semantics (out[i] = x[i-shift])?
# ----------------------------------------------------------------------------
def probe_roll_direction():
    def k(x_ref, o_ref):
        o_ref[...] = pltpu.roll(x_ref[...], 1, axis=1)

    x = jax.lax.broadcasted_iota(jnp.float32, (8, 128), 1)
    out = pl.pallas_call(
        k,
        out_shape=jax.ShapeDtypeStruct((8, 128), jnp.float32),
        in_specs=[pl.BlockSpec((8, 128), lambda: (0, 0))],
        out_specs=pl.BlockSpec((8, 128), lambda: (0, 0)),
    )(x)
    return bool(float(out[0, 1]) == 0.0)   # jnp.roll convention -> out[:,1]==x[:,0]


def _num_tensorcores():
    """Best-effort TensorCore count per device (fallback 1 => fold whole batch)."""
    try:
        d = jax.devices()[0]
    except Exception:
        return 1
    for attr in ("num_cores", "num_cores_per_chip"):
        try:
            v = getattr(d, attr, None)
        except Exception:
            v = None
        if isinstance(v, int) and v >= 1:
            return v
    return 1


# ----------------------------------------------------------------------------
# Fused MAB forward (single Pallas kernel; grid over batch groups)
# ----------------------------------------------------------------------------
def build_mab_forward(n_feats, B, H, W, roll_like_jnp=True, num_groups=None):
    C = n_feats
    HW = H * W
    sgn = -1 if roll_like_jnp else 1      # rotate so that out[n] = x[(n + s) % HW]

    if num_groups is None:
        g = max(1, min(B, _num_tensorcores()))
        while B % g:
            g -= 1
        num_groups = g
    G = num_groups                         # grid steps (parallel across TCs)
    Bg = B // G                            # images folded onto sublanes per step
    R = Bg * C                             # rows per slab

    # --- static row offsets into the packed parameter slabs -------------------
    # matrix slab (7C, 2C): pf | c1 | pl | pw(block-diag) | c3
    MAT_PF, MAT_C1, MAT_PL, MAT_PW, MAT_C3 = 0, 2 * C, 4 * C, 5 * C, 6 * C
    # depthwise slab (5C, 49): stage1 | gate(X3/X5) | stage2 | dw1 | c2
    DW_S1, DW_GATE, DW_S2, DW_DW1, DW_C2 = 0, C, 2 * C, 3 * C, 4 * C
    # column slab (16C+1, 1)
    (CO_LN1G, CO_LN1B, CO_PFB, CO_S1B, CO_GATEB, CO_S2B, CO_PWB, CO_PLB,
     CO_SCALE, CO_LN2G, CO_LN2B, CO_C1B, CO_DW1B, CO_C3B, CO_C2B) = (
        0, C, 2 * C, 4 * C, 5 * C, 6 * C, 7 * C, 8 * C,
        9 * C, 10 * C, 11 * C, 12 * C, 14 * C, 15 * C, 16 * C)

    def kernel(x_ref, mat_ref, dwt_ref, col_ref, o_ref):
        x = x_ref[0]                                   # (R, HW), lane-dense

        mat = mat_ref[...]
        dwt = dwt_ref[...]
        col = col_ref[...]

        def cat(parts):
            return parts[0] if len(parts) == 1 else jnp.concatenate(parts, axis=0)

        def rep(v):                                    # tile per-channel params over folded batch
            return v if Bg == 1 else jnp.concatenate([v] * Bg, axis=0)

        # 1x1-conv weights (Cout, Cin) -> MXU
        pf_w = mat[MAT_PF:MAT_PF + 2 * C, :C]
        c1_w = mat[MAT_C1:MAT_C1 + 2 * C, :C]
        pl_w = mat[MAT_PL:MAT_PL + C, :C]
        pw_w = mat[MAT_PW:MAT_PW + C, :C]              # block-diag(lka3_pw, lka5_pw)
        c3_w = mat[MAT_C3:MAT_C3 + C, :2 * C]

        # merged depthwise tap weights, tiled over folded batch
        w_s1 = rep(dwt[DW_S1:DW_S1 + C, :25])
        w_gt = rep(dwt[DW_GATE:DW_GATE + C, :25])
        w_s2 = rep(dwt[DW_S2:DW_S2 + C, :49])
        w_d1 = rep(dwt[DW_DW1:DW_DW1 + C, :25])
        w_c2 = rep(dwt[DW_C2:DW_C2 + C, :9])

        def ccol(off, n):
            return rep(col[off:off + n, :])
        ln1_g, ln1_b = ccol(CO_LN1G, C), ccol(CO_LN1B, C)
        pf_b = ccol(CO_PFB, 2 * C)
        s1_b, gt_b, s2_b = ccol(CO_S1B, C), ccol(CO_GATEB, C), ccol(CO_S2B, C)
        pw_b, pl_b = ccol(CO_PWB, C), ccol(CO_PLB, C)
        gscale = ccol(CO_SCALE, C)
        ln2_g, ln2_b = ccol(CO_LN2G, C), ccol(CO_LN2B, C)
        c1_b = ccol(CO_C1B, 2 * C)
        dw1_b, c3_b = ccol(CO_DW1B, C), ccol(CO_C3B, C)
        c2_b = col[CO_C2B:CO_C2B + 1, :]               # scalar (1, 1)

        # --- separable boundary masks (memoized 1-D H/W masks) ----------------
        lane = jax.lax.broadcasted_iota(jnp.int32, (1, HW), 1)
        hh = lane // W
        ww = lane - hh * W
        mh, mw, m2 = {}, {}, {}

        def mask2d(dy, dx):
            key = (dy, dx)
            if key not in m2:
                if dy and dy not in mh:
                    mh[dy] = jnp.where((hh + dy >= 0) & (hh + dy < H), 1.0, 0.0).astype(F32)
                if dx and dx not in mw:
                    mw[dx] = jnp.where((ww + dx >= 0) & (ww + dx < W), 1.0, 0.0).astype(F32)
                if dy == 0:
                    m2[key] = mw[dx]
                elif dx == 0:
                    m2[key] = mh[dy]
                else:
                    m2[key] = mh[dy] * mw[dx]
            return m2[key]

        # --- fused depthwise tap pass: one roll per tap, N weighted accumulators
        def tap_pass(v, wbs, k, d):
            p = d * (k - 1) // 2
            accs = [None] * len(wbs)
            for i in range(k):
                for j in range(k):
                    dy, dx = i * d - p, j * d - p
                    s = dy * W + dx
                    tap = v if s == 0 else pltpu.roll(v, (sgn * s) % HW, axis=1)
                    if dy or dx:
                        tap = tap * mask2d(dy, dx)
                    t = i * k + j
                    for n, (wv, _) in enumerate(wbs):
                        c = tap * wv[:, t:t + 1]
                        accs[n] = c if accs[n] is None else accs[n] + c
            return [ac if b is None else ac + b for ac, (_, b) in zip(accs, wbs)]

        # --- 1x1 conv on the MXU (per folded image; segments share one output)
        def conv1x1(seg_ws, b_col):
            outs = []
            for im in range(Bg):
                acc = None
                for seg, w in seg_ws:
                    ck = w.shape[1]
                    dm = jnp.dot(w, seg[im * ck:(im + 1) * ck],
                                 preferred_element_type=jnp.float32)
                    acc = dm if acc is None else acc + dm
                outs.append(acc)
            return cat(outs) + b_col

        # --- channels_first LayerNorm over C (per folded image) ---------------
        def layernorm(v, g_col, b_col):
            outs = []
            for im in range(Bg):
                vi = v[im * C:(im + 1) * C]
                u = jnp.mean(vi, axis=0, keepdims=True)
                vc = vi - u
                var = jnp.mean(vc * vc, axis=0, keepdims=True)
                outs.append(vc * jax.lax.rsqrt(var + 1e-6))
            return cat(outs) * g_col + b_col

        # ========================= SmallObjectGLKA ===========================
        shortcut = x
        xn = layernorm(x, ln1_g, ln1_b)
        proj = conv1x1([(xn, pf_w)], pf_b)              # per image: [a ; xx]
        a = cat([proj[im * 2 * C: im * 2 * C + C] for im in range(Bg)])
        xx = cat([proj[im * 2 * C + C: (im + 1) * 2 * C] for im in range(Bg)])

        # stage-1 depthwise (3x3|5x5 merged) + X3|X5 gate in ONE 25-tap pass
        t1, gate = tap_pass(a, [(w_s1, s1_b), (w_gt, gt_b)], 5, 1)
        # stage-2 dilated depthwise (5x5-d2|7x7-d2 merged) in ONE 49-tap pass
        (t2,) = tap_pass(t1, [(w_s2, s2_b)], 7, 2)
        lka = conv1x1([(t2, pw_w)], pw_b)               # block-diag pointwise
        y = conv1x1([(xx * (lka * gate), pl_w)], pl_b) * gscale + shortcut

        # =============================== SGAB =================================
        xn2 = layernorm(y, ln2_g, ln2_b)
        c1o = conv1x1([(xn2, c1_w)], c1_b)              # per image: [ag ; xc]
        ag = cat([c1o[im * 2 * C: im * 2 * C + C] for im in range(Bg)])
        xc = cat([c1o[im * 2 * C + C: (im + 1) * 2 * C] for im in range(Bg)])
        (dw1o,) = tap_pass(ag, [(w_d1, dw1_b)], 5, 1)
        xm = xc * dw1o

        (c2acc,) = tap_pass(xn2, [(w_c2, None)], 3, 1)  # dense 3x3 C->1 (bias after reduce)
        x3m = cat([xn2[im * C:(im + 1) * C] *
                   (jnp.sum(c2acc[im * C:(im + 1) * C], axis=0, keepdims=True) + c2_b)
                   for im in range(Bg)])

        out = conv1x1([(xm, c3_w[:, :C]), (x3m, c3_w[:, C:])], c3_b)
        o_ref[0] = out

    def forward(x_nchw, slabs):
        mat, dwt, colv = slabs
        xf = x_nchw.astype(F32).reshape(G, R, HW)       # free regroup, no transpose
        out = pl.pallas_call(
            kernel,
            out_shape=jax.ShapeDtypeStruct((G, R, HW), F32),
            grid=(G,),
            in_specs=[pl.BlockSpec((1, R, HW), lambda g: (g, 0, 0)),
                      pl.BlockSpec(mat.shape, lambda g: (0, 0)),
                      pl.BlockSpec(dwt.shape, lambda g: (0, 0)),
                      pl.BlockSpec(colv.shape, lambda g: (0, 0))],
            out_specs=pl.BlockSpec((1, R, HW), lambda g: (g, 0, 0)),
            compiler_params=pltpu.CompilerParams(
                dimension_semantics=("parallel",)),
        )(xf, mat, dwt, colv)
        return out.reshape(B, C, H, W)

    return forward


# ----------------------------------------------------------------------------
# Parameters (torch-layout shapes) + packing into the 3 kernel slabs
# ----------------------------------------------------------------------------
def init_params(n_feats, key):
    C = n_feats
    s1, s2 = C // 2, C - C // 2
    ks = iter(jax.random.split(key, 64))

    def w(shape, scale=0.1):
        return (scale * jax.random.normal(next(ks), shape)).astype(F32)

    p = {}
    # --- SmallObjectGLKA ---
    p['glka_ln_g'] = jnp.ones((C,), F32)
    p['glka_ln_b'] = jnp.zeros((C,), F32)
    # torch inits `scale` to zeros; use small nonzero values so the attention
    # path actually contributes numerically.
    p['glka_scale'] = w((C,))
    p['pf_w'] = w((2 * C, C)); p['pf_b'] = w((2 * C,))
    p['pl_w'] = w((C, C));     p['pl_b'] = w((C,))
    p['lka3_dw3_w'] = w((s1, 3, 3)); p['lka3_dw3_b'] = w((s1,))
    p['lka3_dw5_w'] = w((s1, 5, 5)); p['lka3_dw5_b'] = w((s1,))
    p['lka3_pw_w'] = w((s1, s1));    p['lka3_pw_b'] = w((s1,))
    p['x3_w'] = w((s1, 3, 3));       p['x3_b'] = w((s1,))
    p['lka5_dw5_w'] = w((s2, 5, 5)); p['lka5_dw5_b'] = w((s2,))
    p['lka5_dw7_w'] = w((s2, 7, 7)); p['lka5_dw7_b'] = w((s2,))
    p['lka5_pw_w'] = w((s2, s2));    p['lka5_pw_b'] = w((s2,))
    p['x5_w'] = w((s2, 5, 5));       p['x5_b'] = w((s2,))
    # --- SGAB ---
    p['sgab_ln_g'] = jnp.ones((C,), F32)
    p['sgab_ln_b'] = jnp.zeros((C,), F32)
    p['c1_w'] = w((2 * C, C)); p['c1_b'] = w((2 * C,))
    p['dw1_w'] = w((C, 5, 5)); p['dw1_b'] = w((C,))
    p['c2_w'] = w((C, 3, 3));  p['c2_b'] = w((1,))
    p['c3_w'] = w((C, 2 * C)); p['c3_b'] = w((C,))
    return p


def prep_params(p, n_feats):
    """torch-layout params -> (matrix slab, depthwise-tap slab, column slab)."""
    C = n_feats
    s1 = C // 2

    def flat(w):
        w = jnp.asarray(w, F32)
        return w.reshape(w.shape[0], -1)

    def embed(w, kb):          # (Cg, ks, ks) -> (Cg, kb*kb), small kernel centered
        w = jnp.asarray(w, F32)
        ksz = w.shape[-1]
        off = (kb - ksz) // 2
        out = jnp.zeros((w.shape[0], kb, kb), F32)
        out = out.at[:, off:off + ksz, off:off + ksz].set(w)
        return out.reshape(w.shape[0], kb * kb)

    def padcols(w, n):
        return jnp.pad(w, ((0, 0), (0, n - w.shape[1])))

    # --- depthwise weight slab (5C, 49): stage1 | gate | stage2 | dw1 | c2 ---
    w_s1 = jnp.concatenate([embed(p['lka3_dw3_w'], 5), flat(p['lka5_dw5_w'])], 0)
    w_gt = jnp.concatenate([embed(p['x3_w'], 5), flat(p['x5_w'])], 0)
    w_s2 = jnp.concatenate([embed(p['lka3_dw5_w'], 7), flat(p['lka5_dw7_w'])], 0)
    dwt = jnp.concatenate([padcols(w_s1, 49), padcols(w_gt, 49), w_s2,
                           padcols(flat(p['dw1_w']), 49),
                           padcols(flat(p['c2_w']), 49)], 0)

    # --- matrix slab (7C, 2C): pf | c1 | pl | pw(block-diag) | c3 ------------
    pw_bd = jnp.zeros((C, C), F32)
    pw_bd = pw_bd.at[:s1, :s1].set(jnp.asarray(p['lka3_pw_w'], F32))
    pw_bd = pw_bd.at[s1:, s1:].set(jnp.asarray(p['lka5_pw_w'], F32))

    def padmat(w):
        w = jnp.asarray(w, F32)
        return jnp.pad(w, ((0, 0), (0, 2 * C - w.shape[1])))
    mat = jnp.concatenate([padmat(p['pf_w']), padmat(p['c1_w']),
                           padmat(p['pl_w']), padmat(pw_bd),
                           jnp.asarray(p['c3_w'], F32)], 0)

    # --- column slab (16C+1, 1) ----------------------------------------------
    cols = jnp.concatenate([
        jnp.asarray(v, F32).reshape(-1) for v in (
            p['glka_ln_g'], p['glka_ln_b'], p['pf_b'],
            jnp.concatenate([p['lka3_dw3_b'], p['lka5_dw5_b']]),
            jnp.concatenate([p['x3_b'], p['x5_b']]),
            jnp.concatenate([p['lka3_dw5_b'], p['lka5_dw7_b']]),
            jnp.concatenate([p['lka3_pw_b'], p['lka5_pw_b']]),
            p['pl_b'], p['glka_scale'],
            p['sgab_ln_g'], p['sgab_ln_b'], p['c1_b'],
            p['dw1_b'], p['c3_b'], p['c2_b'])
    ]).reshape(-1, 1)
    return mat, dwt, cols


# ----------------------------------------------------------------------------
# Pure-JAX NCHW reference of the torch module (for correctness checking)
# ----------------------------------------------------------------------------
def ref_layernorm_cf(x, g, b, eps=1e-6):
    u = jnp.mean(x, axis=1, keepdims=True)
    s = jnp.mean((x - u) ** 2, axis=1, keepdims=True)
    xh = (x - u) / jnp.sqrt(s + eps)
    return g[None, :, None, None] * xh + b[None, :, None, None]


def ref_conv1x1(x, w, b):
    return jnp.einsum('oi,bihw->bohw', w, x) + b[None, :, None, None]


def ref_dwconv(x, w, b, k, d):
    _, _, H_, W_ = x.shape
    p = d * (k - 1) // 2
    xp = jnp.pad(x, ((0, 0), (0, 0), (p, p), (p, p)))
    acc = jnp.zeros_like(x)
    for i in range(k):
        for j in range(k):
            acc = acc + (xp[:, :, i * d:i * d + H_, j * d:j * d + W_]
                         * w[:, i, j][None, :, None, None])
    return acc + b[None, :, None, None]


def ref_conv3x3_to1(x, w, b):
    B_, _, H_, W_ = x.shape
    xp = jnp.pad(x, ((0, 0), (0, 0), (1, 1), (1, 1)))
    acc = jnp.zeros((B_, 1, H_, W_), F32)
    for i in range(3):
        for j in range(3):
            acc = acc + jnp.sum(
                xp[:, :, i:i + H_, j:j + W_] * w[:, i, j][None, :, None, None],
                axis=1, keepdims=True)
    return acc + b.reshape(1, 1, 1, 1)


def ref_mab(x, p, n_feats):
    C = n_feats
    s1 = C // 2
    # --- SmallObjectGLKA ---
    shortcut = x
    xn = ref_layernorm_cf(x, p['glka_ln_g'], p['glka_ln_b'])
    proj = ref_conv1x1(xn, p['pf_w'], p['pf_b'])
    a, xx = proj[:, :C], proj[:, C:]
    a1, a2 = a[:, :s1], a[:, s1:]
    t = ref_dwconv(a1, p['lka3_dw3_w'], p['lka3_dw3_b'], 3, 1)
    t = ref_dwconv(t, p['lka3_dw5_w'], p['lka3_dw5_b'], 5, 2)
    lka3 = ref_conv1x1(t, p['lka3_pw_w'], p['lka3_pw_b'])
    b1 = lka3 * ref_dwconv(a1, p['x3_w'], p['x3_b'], 3, 1)
    t = ref_dwconv(a2, p['lka5_dw5_w'], p['lka5_dw5_b'], 5, 1)
    t = ref_dwconv(t, p['lka5_dw7_w'], p['lka5_dw7_b'], 7, 2)
    lka5 = ref_conv1x1(t, p['lka5_pw_w'], p['lka5_pw_b'])
    b2 = lka5 * ref_dwconv(a2, p['x5_w'], p['x5_b'], 5, 1)
    aa = jnp.concatenate([b1, b2], axis=1)
    y = (ref_conv1x1(xx * aa, p['pl_w'], p['pl_b'])
         * p['glka_scale'][None, :, None, None] + shortcut)
    # --- SGAB ---
    xn2 = ref_layernorm_cf(y, p['sgab_ln_g'], p['sgab_ln_b'])
    c1 = ref_conv1x1(xn2, p['c1_w'], p['c1_b'])
    ag, xc = c1[:, :C], c1[:, C:]
    xm = xc * ref_dwconv(ag, p['dw1_w'], p['dw1_b'], 5, 1)
    x3m = xn2 * ref_conv3x3_to1(xn2, p['c2_w'], p['c2_b'])
    cat = jnp.concatenate([xm, x3m], axis=1)
    return ref_conv1x1(cat, p['c3_w'], p['c3_b'])


# ----------------------------------------------------------------------------
if __name__ == "__main__":
    n_feats, B, H, W = 8, 2, 16, 16

    key = jax.random.PRNGKey(0)
    kx, kp = jax.random.split(key)
    x = jax.random.normal(kx, (B, n_feats, H, W), dtype=F32)
    params = init_params(n_feats, kp)
    slabs = prep_params(params, n_feats)

    roll_like_jnp = probe_roll_direction()
    fwd = jax.jit(build_mab_forward(n_feats, B, H, W, roll_like_jnp))
    out = fwd(x, slabs)
    jax.block_until_ready(out)

    assert out.shape == (B, n_feats, H, W), out.shape
    assert bool(jnp.all(jnp.isfinite(out)))

    # cross-check against the pure-JAX NCHW reference of the torch module
    ref = ref_mab(x, params, n_feats)
    err = float(jnp.max(jnp.abs(out - ref)))
    assert err < 1e-3, f"kernel/reference mismatch: max abs err = {err}"

    print("KERNEL_OK")
</pallas_src>

<mosaic_0001>
module attributes {stable_mosaic.version = 11 : i64} {
  func.func @k(%arg0: memref<8x128xf32, #tpu.memory_space<vmem>>, %arg1: memref<8x128xf32, #tpu.memory_space<vmem>>) attributes {dimension_semantics = [], scalar_prefetch = 0 : i64, scratch_operands = 0 : i64, tpu.core_type = #tpu.core_type<tc>} {
    %c0 = arith.constant 0 : index
    %c0_0 = arith.constant 0 : index
    %0 = vector.load %arg0[%c0, %c0_0] : memref<8x128xf32, #tpu.memory_space<vmem>>, vector<8x128xf32>
    %c1_i32 = arith.constant 1 : i32
    %1 = tpu.dynamic_rotate %0 by %c1_i32 dim 1 : vector<8x128xf32>, i32 -> vector<8x128xf32>
    %c0_1 = arith.constant 0 : index
    %c0_2 = arith.constant 0 : index
    %2 = vector.load %arg1[%c0_1, %c0_2] : memref<8x128xf32, #tpu.memory_space<vmem>>, vector<8x128xf32>
    tpu.vector_store %arg1[%c0_1, %c0_2], %1 {strides = array<i32>} : memref<8x128xf32, #tpu.memory_space<vmem>>, vector<8x128xf32>,
    return
  }
}

</mosaic_0001>

<llo_original>
// kernel: tpu_custom_call.1
$region0: #{tpu_custom_call.1}
  #allocation0 [shape = 'u32[]', space=smem, size = 0x4, offset = 0x4, fixed_abs, tag = 'smem constant byte address 0x4 - core index']
  #allocation1 [shape = 'u32[72,128]{1,0:T(1,128)}', space=vmem, size = 0x9000, scoped, tag = 'internal scratch']
  %s0 = inlined_call_operand.hbm [shape: f32[8,128], index: 0, kind: input, shape index: {}]
  %s1 = inlined_call_operand.hbm [shape: f32[8,128], index: 1, kind: output, shape index: {}]
  %s2 = sld [smem:[#allocation0]]
  $region18: #{tpu_custom_call.1} parent=0
    _
  %s4 = ssub.s32 1, %s2
  %s5 = scalar_select 0, %s4, %s2
  $region1: #{tpu_custom_call.1} parent=0
    #allocation2 [shape = 'u8[4096]{0}', space=vmem, size = 0x1000, scoped, tag = 'input window, operand 0, single buffered']
    #allocation3 [shape = 's32[1]{0}', space=sflag, size = 0x4, scoped, tag = 'scoped memory for tpu_custom_call.1']
    #allocation4 [shape = 's32[1]{0}', space=sflag, size = 0x4, scoped, tag = 'scoped memory for tpu_custom_call.1']
    #allocation5 [shape = 'u8[4096]{0}', space=vmem, size = 0x1000, scoped, tag = 'output window, operand 0, single buffered']
    %6 = vsyncpa [#allocation3], 0
    %7 = vsyncpa [#allocation4], 0
    // Predicated region
    $region2: #{tpu_custom_call.1} parent=1 // pred_check
      _
    $region3: #{tpu_custom_call.1} parent=1 // pred_check_branch
      %9 = sbr.rel (0) target = $region5
    $region4: #{tpu_custom_call.1} parent=1 // pred_region
      %11 = vsyncadd [#allocation3], 0
      %s13 = sshll.u32 %s0, 4
      %s14 = int_to_ptr.hbm [resolvable:$true] %s13
      %s15 = sshll.u32 [#allocation2], 4
      %s16 = int_to_ptr.vmem [resolvable:$true] %s15
      %18 = dma.hbm_to_vmem [thread:$0]  %s14, 128, %s16, [#allocation3]
    $region5: #{tpu_custom_call.1} parent=1 // pred_fallthru
      _
    // Predicated region
    $region6: #{tpu_custom_call.1} parent=1 // pred_check
      _
    $region7: #{tpu_custom_call.1} parent=1 // pred_check_branch
      %20 = sbr.rel (0) target = $region9
    $region8: #{tpu_custom_call.1} parent=1 // pred_region
      %22 = dma.done [#allocation3], 128
    $region9: #{tpu_custom_call.1} parent=1 // pred_fallthru
      _
    %v23 = vld [vmem:[#allocation2] sm:$0xff]
    %24 = vrot.lane.b32.xlu0 %v23, 1
    %v25 = vpop.permute.xlu0 %24
    %26 = vst [vmem:[#allocation5] sm:$0xff] %v25
    // Predicated region
    $region10: #{tpu_custom_call.1} parent=1 // pred_check
      _
    $region11: #{tpu_custom_call.1} parent=1 // pred_check_branch
      %28 = sbr.rel (0) target = $region13
    $region12: #{tpu_custom_call.1} parent=1 // pred_region
      %30 = vsyncadd [#allocation4], 0
      %s32 = sshll.u32 [#allocation5], 4
      %s33 = int_to_ptr.vmem [resolvable:$true] %s32
      %s34 = sshll.u32 %s1, 4
      %s35 = int_to_ptr.hbm [resolvable:$true] %s34
      %37 = dma.vmem_to_hbm [thread:$0]  %s33, 128, %s35, [#allocation4]
    $region13: #{tpu_custom_call.1} parent=1 // pred_fallthru
      _
    // Predicated region
    $region14: #{tpu_custom_call.1} parent=1 // pred_check
      _
    $region15: #{tpu_custom_call.1} parent=1 // pred_check_branch
      %39 = sbr.rel (0) target = $region17
    $region16: #{tpu_custom_call.1} parent=1 // pred_region
      %41 = dma.done [#allocation4], 128
    $region17: #{tpu_custom_call.1} parent=1 // pred_fallthru
      _
    %42 = vsyncpa [#allocation3], 1
    %43 = vsyncpa [#allocation4], 1

</llo_original>
